<compile_context>
chip_gen: v7x
topology: tpu7x:2x2x1
jax: 0.10.0
libtpu: 0.0.40
codegen_flags: <defaults>
</compile_context>

<pallas_src>
import functools

import jax
import jax.numpy as jnp
from jax.experimental import pallas as pl
from jax.experimental.pallas import tpu as pltpu

H1, H2, H3, H4 = 512, 256, 128, 1
OUT_PAD = 128  # lane-dense padded width of the final layer


def mlp_kernel(x_ref, w1_ref, b1_ref, w2_ref, b2_ref,
               w3_ref, b3_ref, w4_ref, b4_ref, o_ref):
    cdt = w1_ref.dtype                      # compute dtype of the matmul operands
    x = x_ref[...].astype(cdt)
    # fc1 + ReLU (dropout1 == identity at inference)
    h = jnp.dot(x, w1_ref[...], preferred_element_type=jnp.float32) + b1_ref[...]
    h = jnp.maximum(h, 0.0)
    # fc2 + ReLU (dropout2 == identity at inference)
    h = jnp.dot(h.astype(cdt), w2_ref[...], preferred_element_type=jnp.float32) + b2_ref[...]
    h = jnp.maximum(h, 0.0)
    # fc3 + ReLU
    h = jnp.dot(h.astype(cdt), w3_ref[...], preferred_element_type=jnp.float32) + b3_ref[...]
    h = jnp.maximum(h, 0.0)
    # fc4, padded to 128 output lanes (cols 1..127 have zero weights/bias) so the
    # final store is a dense, unmasked (TB, 128) block.
    o_ref[...] = (jnp.dot(h.astype(cdt), w4_ref[...], preferred_element_type=jnp.float32)
                  + b4_ref[...])


def _round_up(x, m):
    return ((x + m - 1) // m) * m


@functools.partial(jax.jit, static_argnames=("batch_tile", "compute_dtype"))
def improved_nn_forward(x, params, batch_tile=256, compute_dtype=jnp.bfloat16):
    """x: [B, input_dim] float32.  params: dict of (in,out) f32 weights + (1,out) f32 biases."""
    B, D = x.shape
    assert batch_tile % 8 == 0, "batch_tile must be a multiple of 8 (sublane granularity)"
    # Cap the tile for tiny batches (keeps padding minimal while staying 8-aligned).
    TB = min(batch_tile, _round_up(B, 8))
    Bp = _round_up(B, TB)
    if Bp != B:
        x = jnp.pad(x, ((0, Bp - B), (0, 0)))

    cdt = jnp.dtype(compute_dtype)
    w1, b1 = params["w1"].astype(cdt), params["b1"]
    w2, b2 = params["w2"].astype(cdt), params["b2"]
    w3, b3 = params["w3"].astype(cdt), params["b3"]
    # Zero-pad the final layer to OUT_PAD columns for a lane-dense output block.
    w4 = jnp.zeros((H3, OUT_PAD), cdt).at[:, :H4].set(params["w4"].astype(cdt))
    b4 = jnp.zeros((1, OUT_PAD), jnp.float32).at[:, :H4].set(params["b4"])

    flops = 2 * Bp * (D * H1 + H1 * H2 + H2 * H3 + H3 * OUT_PAD)
    bytes_accessed = (
        x.size * x.dtype.itemsize
        + sum(a.size * a.dtype.itemsize for a in (w1, b1, w2, b2, w3, b3, w4, b4))
        + Bp * OUT_PAD * 4)

    full = lambda arr: pl.BlockSpec(arr.shape, lambda i: (0, 0))

    out = pl.pallas_call(
        mlp_kernel,
        out_shape=jax.ShapeDtypeStruct((Bp, OUT_PAD), jnp.float32),
        grid_spec=pltpu.PrefetchScalarGridSpec(
            num_scalar_prefetch=0,
            grid=(Bp // TB,),
            in_specs=[
                pl.BlockSpec((TB, D), lambda i: (i, 0)),   # x tile
                full(w1), full(b1),
                full(w2), full(b2),
                full(w3), full(b3),
                full(w4), full(b4),
            ],
            out_specs=pl.BlockSpec((TB, OUT_PAD), lambda i: (i, 0)),
        ),
        compiler_params=pltpu.CompilerParams(
            dimension_semantics=("parallel",)),
        cost_estimate=pl.CostEstimate(
            flops=flops, transcendentals=0, bytes_accessed=bytes_accessed),
    )(x, w1, b1, w2, b2, w3, b3, w4, b4)

    return out[:B, :H4]


def init_params(key, input_dim):
    """Deterministic init matching the PyTorch module:
    weights ~ xavier_uniform_, biases ~ default nn.Linear uniform(-1/sqrt(fan_in), +)."""
    dims = [(input_dim, H1), (H1, H2), (H2, H3), (H3, H4)]
    params = {}
    for idx, (fan_in, fan_out) in enumerate(dims, start=1):
        key, kw, kb = jax.random.split(key, 3)
        limit = (6.0 / (fan_in + fan_out)) ** 0.5           # xavier_uniform_
        w = jax.random.uniform(kw, (fan_in, fan_out), jnp.float32, -limit, limit)
        bbound = 1.0 / (fan_in ** 0.5)                      # nn.Linear default bias init
        b = jax.random.uniform(kb, (1, fan_out), jnp.float32, -bbound, bbound)
        params[f"w{idx}"] = w
        params[f"b{idx}"] = b
    return params


def reference_forward(x, params, compute_dtype=jnp.float32):
    """Pure-JAX reference mirroring the kernel's cast/accumulate behaviour."""
    cdt = jnp.dtype(compute_dtype)
    h = x
    for i in (1, 2, 3, 4):
        w = params[f"w{i}"].astype(cdt)
        h = jnp.dot(h.astype(cdt), w, preferred_element_type=jnp.float32) + params[f"b{i}"]
        if i < 4:
            h = jnp.maximum(h, 0.0)
    return h


if __name__ == "__main__":
    key = jax.random.PRNGKey(0)
    k_params, k_x, k_x2 = jax.random.split(key, 3)

    batch, input_dim = 8, 32
    params = init_params(k_params, input_dim)
    x = jax.random.normal(k_x, (batch, input_dim), jnp.float32)

    # 1) f32 path: tight check against the pure-JAX reference.
    y32 = jax.block_until_ready(
        improved_nn_forward(x, params, compute_dtype=jnp.float32))
    y_ref32 = reference_forward(x, params, jnp.float32)
    assert y32.shape == (batch, 1), y32.shape
    assert jnp.allclose(y32, y_ref32, atol=1e-4, rtol=1e-4), (
        float(jnp.max(jnp.abs(y32 - y_ref32))))

    # 2) bf16 path (default, MXU-friendly): check against a bf16-mimicking reference.
    y16 = jax.block_until_ready(improved_nn_forward(x, params))
    y_ref16 = reference_forward(x, params, jnp.bfloat16)
    assert jnp.allclose(y16, y_ref16, atol=1e-2, rtol=1e-2), (
        float(jnp.max(jnp.abs(y16 - y_ref16))))

    # 3) Multi-step grid + batch padding path (exercises the "parallel" grid axis).
    xb = jax.random.normal(k_x2, (300, input_dim), jnp.float32)
    yb = jax.block_until_ready(improved_nn_forward(xb, params, batch_tile=128))
    yb_ref = reference_forward(xb, params, jnp.bfloat16)
    assert yb.shape == (300, 1), yb.shape
    assert jnp.allclose(yb, yb_ref, atol=1e-2, rtol=1e-2), (
        float(jnp.max(jnp.abs(yb - yb_ref))))

    print("KERNEL_OK")
</pallas_src>

<mosaic_0001>
module attributes {stable_mosaic.version = 11 : i64} {
  func.func @mlp_kernel(%arg0: i32, %arg1: memref<8x32xf32, #tpu.memory_space<vmem>>, %arg2: memref<32x512xf32, #tpu.memory_space<vmem>>, %arg3: memref<1x512xf32, #tpu.memory_space<vmem>>, %arg4: memref<512x256xf32, #tpu.memory_space<vmem>>, %arg5: memref<1x256xf32, #tpu.memory_space<vmem>>, %arg6: memref<256x128xf32, #tpu.memory_space<vmem>>, %arg7: memref<1x128xf32, #tpu.memory_space<vmem>>, %arg8: memref<128x128xf32, #tpu.memory_space<vmem>>, %arg9: memref<1x128xf32, #tpu.memory_space<vmem>>, %arg10: memref<8x128xf32, #tpu.memory_space<vmem>>) attributes {dimension_semantics = [#tpu.dimension_semantics<parallel>], iteration_bounds = array<i64: 1>, scalar_prefetch = 0 : i64, scratch_operands = 0 : i64, tpu.core_type = #tpu.core_type<tc>, window_params = [{transform_indices = @transform_0, window_bounds = array<i64: 8, 32>}, {pipeline_mode = #tpu.pipeline_mode<synchronous>, transform_indices = @transform_1, window_bounds = array<i64: 32, 512>}, {pipeline_mode = #tpu.pipeline_mode<synchronous>, transform_indices = @transform_2, window_bounds = array<i64: 1, 512>}, {pipeline_mode = #tpu.pipeline_mode<synchronous>, transform_indices = @transform_3, window_bounds = array<i64: 512, 256>}, {pipeline_mode = #tpu.pipeline_mode<synchronous>, transform_indices = @transform_4, window_bounds = array<i64: 1, 256>}, {pipeline_mode = #tpu.pipeline_mode<synchronous>, transform_indices = @transform_5, window_bounds = array<i64: 256, 128>}, {pipeline_mode = #tpu.pipeline_mode<synchronous>, transform_indices = @transform_6, window_bounds = array<i64: 1, 128>}, {pipeline_mode = #tpu.pipeline_mode<synchronous>, transform_indices = @transform_7, window_bounds = array<i64: 128, 128>}, {pipeline_mode = #tpu.pipeline_mode<synchronous>, transform_indices = @transform_8, window_bounds = array<i64: 1, 128>}, {transform_indices = @transform_9, window_bounds = array<i64: 8, 128>}]} {
    %c0 = arith.constant 0 : index
    %c0_0 = arith.constant 0 : index
    %0 = vector.load %arg1[%c0, %c0_0] : memref<8x32xf32, #tpu.memory_space<vmem>>, vector<8x32xf32>
    %c0_1 = arith.constant 0 : index
    %c0_2 = arith.constant 0 : index
    %1 = vector.load %arg2[%c0_1, %c0_2] : memref<32x512xf32, #tpu.memory_space<vmem>>, vector<32x512xf32>
    %cst = arith.constant dense<0.000000e+00> : vector<8x512xf32>
    %2 = tpu.matmul %0, %1, %cst {dimension_numbers = #tpu.dot_dimension_numbers<[1], [0], [0], [1], [0, 0, 1, 1], [], []>} : vector<8x32xf32>, vector<32x512xf32>, vector<8x512xf32> -> vector<8x512xf32>
    %c0_3 = arith.constant 0 : index
    %c0_4 = arith.constant 0 : index
    %3 = vector.load %arg3[%c0_3, %c0_4] : memref<1x512xf32, #tpu.memory_space<vmem>>, vector<1x512xf32>
    %4 = vector.broadcast %3 : vector<1x512xf32> to vector<8x512xf32>
    %5 = arith.addf %2, %4 : vector<8x512xf32>
    %cst_5 = arith.constant 0.000000e+00 : f32
    %6 = vector.broadcast %cst_5 : f32 to vector<8x512xf32>
    %7 = arith.maximumf %5, %6 : vector<8x512xf32>
    %c0_6 = arith.constant 0 : index
    %c0_7 = arith.constant 0 : index
    %8 = vector.load %arg4[%c0_6, %c0_7] : memref<512x256xf32, #tpu.memory_space<vmem>>, vector<512x256xf32>
    %cst_8 = arith.constant dense<0.000000e+00> : vector<8x256xf32>
    %9 = tpu.matmul %7, %8, %cst_8 {dimension_numbers = #tpu.dot_dimension_numbers<[1], [0], [0], [1], [0, 0, 1, 1], [], []>} : vector<8x512xf32>, vector<512x256xf32>, vector<8x256xf32> -> vector<8x256xf32>
    %c0_9 = arith.constant 0 : index
    %c0_10 = arith.constant 0 : index
    %10 = vector.load %arg5[%c0_9, %c0_10] : memref<1x256xf32, #tpu.memory_space<vmem>>, vector<1x256xf32>
    %11 = vector.broadcast %10 : vector<1x256xf32> to vector<8x256xf32>
    %12 = arith.addf %9, %11 : vector<8x256xf32>
    %cst_11 = arith.constant 0.000000e+00 : f32
    %13 = vector.broadcast %cst_11 : f32 to vector<8x256xf32>
    %14 = arith.maximumf %12, %13 : vector<8x256xf32>
    %c0_12 = arith.constant 0 : index
    %c0_13 = arith.constant 0 : index
    %15 = vector.load %arg6[%c0_12, %c0_13] : memref<256x128xf32, #tpu.memory_space<vmem>>, vector<256x128xf32>
    %cst_14 = arith.constant dense<0.000000e+00> : vector<8x128xf32>
    %16 = tpu.matmul %14, %15, %cst_14 {dimension_numbers = #tpu.dot_dimension_numbers<[1], [0], [0], [1], [0, 0, 1, 1], [], []>} : vector<8x256xf32>, vector<256x128xf32>, vector<8x128xf32> -> vector<8x128xf32>
    %c0_15 = arith.constant 0 : index
    %c0_16 = arith.constant 0 : index
    %17 = vector.load %arg7[%c0_15, %c0_16] : memref<1x128xf32, #tpu.memory_space<vmem>>, vector<1x128xf32>
    %18 = vector.broadcast %17 : vector<1x128xf32> to vector<8x128xf32>
    %19 = arith.addf %16, %18 : vector<8x128xf32>
    %cst_17 = arith.constant 0.000000e+00 : f32
    %20 = vector.broadcast %cst_17 : f32 to vector<8x128xf32>
    %21 = arith.maximumf %19, %20 : vector<8x128xf32>
    %c0_18 = arith.constant 0 : index
    %c0_19 = arith.constant 0 : index
    %22 = vector.load %arg8[%c0_18, %c0_19] : memref<128x128xf32, #tpu.memory_space<vmem>>, vector<128x128xf32>
    %cst_20 = arith.constant dense<0.000000e+00> : vector<8x128xf32>
    %23 = tpu.matmul %21, %22, %cst_20 {dimension_numbers = #tpu.dot_dimension_numbers<[1], [0], [0], [1], [0, 0, 1, 1], [], []>} : vector<8x128xf32>, vector<128x128xf32>, vector<8x128xf32> -> vector<8x128xf32>
    %c0_21 = arith.constant 0 : index
    %c0_22 = arith.constant 0 : index
    %24 = vector.load %arg9[%c0_21, %c0_22] : memref<1x128xf32, #tpu.memory_space<vmem>>, vector<1x128xf32>
    %25 = vector.broadcast %24 : vector<1x128xf32> to vector<8x128xf32>
    %26 = arith.addf %23, %25 : vector<8x128xf32>
    %c0_23 = arith.constant 0 : index
    %c0_24 = arith.constant 0 : index
    %27 = vector.load %arg10[%c0_23, %c0_24] : memref<8x128xf32, #tpu.memory_space<vmem>>, vector<8x128xf32>
    tpu.vector_store %arg10[%c0_23, %c0_24], %26 {strides = array<i32>} : memref<8x128xf32, #tpu.memory_space<vmem>>, vector<8x128xf32>,
    return
  }
  func.func @transform_0(%arg0: i32) -> (i32, i32) {
    %c0_i32 = arith.constant 0 : i32
    %c0_i32_0 = arith.constant 0 : i32
    return %arg0, %c0_i32 : i32, i32
  }
  func.func @transform_1(%arg0: i32) -> (i32, i32) {
    %c0_i32 = arith.constant 0 : i32
    %c0_i32_0 = arith.constant 0 : i32
    %c0_i32_1 = arith.constant 0 : i32
    return %c0_i32, %c0_i32_0 : i32, i32
  }
  func.func @transform_2(%arg0: i32) -> (i32, i32) {
    %c0_i32 = arith.constant 0 : i32
    %c0_i32_0 = arith.constant 0 : i32
    %c0_i32_1 = arith.constant 0 : i32
    return %c0_i32, %c0_i32_0 : i32, i32
  }
  func.func @transform_3(%arg0: i32) -> (i32, i32) {
    %c0_i32 = arith.constant 0 : i32
    %c0_i32_0 = arith.constant 0 : i32
    %c0_i32_1 = arith.constant 0 : i32
    return %c0_i32, %c0_i32_0 : i32, i32
  }
  func.func @transform_4(%arg0: i32) -> (i32, i32) {
    %c0_i32 = arith.constant 0 : i32
    %c0_i32_0 = arith.constant 0 : i32
    %c0_i32_1 = arith.constant 0 : i32
    return %c0_i32, %c0_i32_0 : i32, i32
  }
  func.func @transform_5(%arg0: i32) -> (i32, i32) {
    %c0_i32 = arith.constant 0 : i32
    %c0_i32_0 = arith.constant 0 : i32
    %c0_i32_1 = arith.constant 0 : i32
    return %c0_i32, %c0_i32_0 : i32, i32
  }
  func.func @transform_6(%arg0: i32) -> (i32, i32) {
    %c0_i32 = arith.constant 0 : i32
    %c0_i32_0 = arith.constant 0 : i32
    %c0_i32_1 = arith.constant 0 : i32
    return %c0_i32, %c0_i32_0 : i32, i32
  }
  func.func @transform_7(%arg0: i32) -> (i32, i32) {
    %c0_i32 = arith.constant 0 : i32
    %c0_i32_0 = arith.constant 0 : i32
    %c0_i32_1 = arith.constant 0 : i32
    return %c0_i32, %c0_i32_0 : i32, i32
  }
  func.func @transform_8(%arg0: i32) -> (i32, i32) {
    %c0_i32 = arith.constant 0 : i32
    %c0_i32_0 = arith.constant 0 : i32
    %c0_i32_1 = arith.constant 0 : i32
    return %c0_i32, %c0_i32_0 : i32, i32
  }
  func.func @transform_9(%arg0: i32) -> (i32, i32) {
    %c0_i32 = arith.constant 0 : i32
    %c0_i32_0 = arith.constant 0 : i32
    return %arg0, %c0_i32 : i32, i32
  }
}

</mosaic_0001>

<llo_original>
// kernel: improved_nn_forward.1
$region0: #{improved_nn_forward.1}
  #allocation0 [shape = 'u32[]', space=smem, size = 0x4, offset = 0x4, fixed_abs, tag = 'smem constant byte address 0x4 - core index']
  #allocation1 [shape = 'u32[144,128]{1,0:T(1,128)}', space=vmem, size = 0x12000, scoped, tag = 'internal scratch']
  %s0 = inlined_call_operand.vmem [shape: f32[8,32], index: 0, kind: input, shape index: {}]
  %s1 = inlined_call_operand.vmem [shape: f32[32,512], index: 1, kind: input, shape index: {}]
  %s2 = inlined_call_operand.vmem [shape: f32[1,512], index: 2, kind: input, shape index: {}]
  %s3 = inlined_call_operand.hbm [shape: f32[512,256], index: 3, kind: input, shape index: {}]
  %s4 = inlined_call_operand.vmem [shape: f32[1,256], index: 4, kind: input, shape index: {}]
  %s5 = inlined_call_operand.vmem [shape: f32[256,128], index: 5, kind: input, shape index: {}]
  %s6 = inlined_call_operand.vmem [shape: f32[1,128], index: 6, kind: input, shape index: {}]
  %s7 = inlined_call_operand.vmem [shape: f32[128,128], index: 7, kind: input, shape index: {}]
  %s8 = inlined_call_operand.vmem [shape: f32[1,128], index: 8, kind: input, shape index: {}]
  %s9 = inlined_call_operand.vmem [shape: f32[8,128], index: 9, kind: output, shape index: {}]
  %s10 = sld [smem:[#allocation0]]
  $region50: #{improved_nn_forward.1} parent=0
    _
  %s12 = ssub.s32 1, %s10
  %s13 = scalar_select 0, %s12, %s10
  $region1: #{improved_nn_forward.1} parent=0
    #allocation2 [shape = 'u8[524288]{0}', space=vmem, size = 0x80000, scoped, tag = 'input window, operand 3, single buffered']
    #allocation3 [shape = 's32[1]{0}', space=sflag, size = 0x4, scoped, tag = 'scoped memory for improved_nn_forward.1']
    %14 = vsyncpa [#allocation3], 0
    // Predicated region
    $region2: #{improved_nn_forward.1} parent=1 // pred_check
      _
    $region3: #{improved_nn_forward.1} parent=1 // pred_check_branch
      %16 = sbr.rel (0) target = $region5
    $region4: #{improved_nn_forward.1} parent=1 // pred_region
      _
    $region5: #{improved_nn_forward.1} parent=1 // pred_fallthru
      _
    // Predicated region
    $region6: #{improved_nn_forward.1} parent=1 // pred_check
      _
    $region7: #{improved_nn_forward.1} parent=1 // pred_check_branch
      %18 = sbr.rel (0) target = $region9
    $region8: #{improved_nn_forward.1} parent=1 // pred_region
      _
    $region9: #{improved_nn_forward.1} parent=1 // pred_fallthru
      _
    // Predicated region
    $region10: #{improved_nn_forward.1} parent=1 // pred_check
      _
    $region11: #{improved_nn_forward.1} parent=1 // pred_check_branch
      %20 = sbr.rel (0) target = $region13
    $region12: #{improved_nn_forward.1} parent=1 // pred_region
      _
    $region13: #{improved_nn_forward.1} parent=1 // pred_fallthru
      _
    // Predicated region
    $region14: #{improved_nn_forward.1} parent=1 // pred_check
      _
    $region15: #{improved_nn_forward.1} parent=1 // pred_check_branch
      %22 = sbr.rel (0) target = $region17
    $region16: #{improved_nn_forward.1} parent=1 // pred_region
      %s24 = ssub.s32 16384, 16384
      %25 = vsyncadd [#allocation3], %s24
      %s26 = sshll.u32 [#allocation2], 4
      %s27 = int_to_ptr.vmem [resolvable:$true] %s26
      %32 = dma.hbm_to_vmem [thread:$0]  %s3, 16384, %s27, [#allocation3], 256, 256, 16
    $region17: #{improved_nn_forward.1} parent=1 // pred_fallthru
      _
    // Predicated region
    $region18: #{improved_nn_forward.1} parent=1 // pred_check
      _
    $region19: #{improved_nn_forward.1} parent=1 // pred_check_branch
      %34 = sbr.rel (0) target = $region21
    $region20: #{improved_nn_forward.1} parent=1 // pred_region
      _
    $region21: #{improved_nn_forward.1} parent=1 // pred_fallthru
      _
    // Predicated region
    $region22: #{improved_nn_forward.1} parent=1 // pred_check
      _
    $region23: #{improved_nn_forward.1} parent=1 // pred_check_branch
      %36 = sbr.rel (0) target = $region25
    $region24: #{improved_nn_forward.1} parent=1 // pred_region
      _
    $region25: #{improved_nn_forward.1} parent=1 // pred_fallthru
      _
    // Predicated region
    $region26: #{improved_nn_forward.1} parent=1 // pred_check
      _
    $region27: #{improved_nn_forward.1} parent=1 // pred_check_branch
      %38 = sbr.rel (0) target = $region29
    $region28: #{improved_nn_forward.1} parent=1 // pred_region
      _
    $region29: #{improved_nn_forward.1} parent=1 // pred_fallthru
      _
    // Predicated region
    $region30: #{improved_nn_forward.1} parent=1 // pred_check
      _
    $region31: #{improved_nn_forward.1} parent=1 // pred_check_branch
      %40 = sbr.rel (0) target = $region33
    $region32: #{improved_nn_forward.1} parent=1 // pred_region
      _
    $region33: #{improved_nn_forward.1} parent=1 // pred_fallthru
      _
    // Predicated region
    $region34: #{improved_nn_forward.1} parent=1 // pred_check
      _
    $region35: #{improved_nn_forward.1} parent=1 // pred_check_branch
      %42 = sbr.rel (0) target = $region37
    $region36: #{improved_nn_forward.1} parent=1 // pred_region
      _
    $region37: #{improved_nn_forward.1} parent=1 // pred_fallthru
      _
    // Predicated region
    $region38: #{improved_nn_forward.1} parent=1 // pred_check
      _
    $region39: #{improved_nn_forward.1} parent=1 // pred_check_branch
      %44 = sbr.rel (0) target = $region41
    $region40: #{improved_nn_forward.1} parent=1 // pred_region
      %45 = dma.done [#allocation3], 16384
    $region41: #{improved_nn_forward.1} parent=1 // pred_fallthru
      _
    %v46 = vld [vmem:[%s0] sm:$0xff]
    %v47 = vld [vmem:[%s1] sm:$0xff]
    %v48 = vld [vmem:[%s1 + $0x8] sm:$0xff]
    %v49 = vld [vmem:[%s1 + $0x10] sm:$0xff]
    %v50 = vld [vmem:[%s1 + $0x18] sm:$0xff]
    %v51 = vld [vmem:[%s1 + $0x20] sm:$0xff]
    %v52 = vld [vmem:[%s1 + $0x28] sm:$0xff]
    %v53 = vld [vmem:[%s1 + $0x30] sm:$0xff]
    %v54 = vld [vmem:[%s1 + $0x38] sm:$0xff]
    %v55 = vld [vmem:[%s1 + $0x40] sm:$0xff]
    %v56 = vld [vmem:[%s1 + $0x48] sm:$0xff]
    %v57 = vld [vmem:[%s1 + $0x50] sm:$0xff]
    %v58 = vld [vmem:[%s1 + $0x58] sm:$0xff]
    %v59 = vld [vmem:[%s1 + $0x60] sm:$0xff]
    %v60 = vld [vmem:[%s1 + $0x68] sm:$0xff]
    %v61 = vld [vmem:[%s1 + $0x70] sm:$0xff]
    %v62 = vld [vmem:[%s1 + $0x78] sm:$0xff]
    %v63 = vld [vmem:[%s2] sm:$0xf]
    %v65 = vlaneseq
    %v66 = vshrl.u32 %v65, 7
    %v67 = vsub.s32 0, %v66
    %v68 = vrot.slane %v63, %v67
    %v69 = vlaneseq
    %v70 = vshrl.u32 %v69, 7
    %v71 = vsub.s32 1, %v70
    %v72 = vrot.slane %v63, %v71
    %v73 = vlaneseq
    %v74 = vshrl.u32 %v73, 7
    %v75 = vsub.s32 2, %v74
    %v76 = vrot.slane %v63, %v75
    %v77 = vlaneseq
    %v78 = vshrl.u32 %v77, 7
    %v79 = vsub.s32 3, %v78
    %v80 = vrot.slane %v63, %v79
    %vm85 = vcmask 261120
    %v87 = vsel %vm85, %v46, 0
    %89 = vmatprep.subr.mxu0 %v48
    %90 = vmatpush1.msra.mxu0 %v47
    %91 = vmatprep.subr.mxu0 %v52
    %92 = vmatpush1.msra.mxu0 %v51
    %93 = vmatprep.subr.mxu0 %v56
    %94 = vmatpush1.msra.mxu0 %v55
    %95 = vmatprep.subr.mxu0 %v60
    %96 = vmatpush1.msra.mxu0 %v59
    %97 = vmatprep.subr.mxu0 0.0
    %98 = vmatpush1.msra.mxu0 0.0
    %99 = vmatprep.subr.mxu0 0.0
    %100 = vmatpush1.msra.mxu0 0.0
    %101 = vmatprep.subr.mxu0 0.0
    %102 = vmatpush1.msra.mxu0 0.0
    %103 = vmatprep.subr.mxu0 0.0
    %104 = vmatpush1.msra.mxu0 0.0
    %105 = vmatprep.subr.mxu0 0.0
    %106 = vmatpush1.msra.mxu0 0.0
    %107 = vmatprep.subr.mxu0 0.0
    %108 = vmatpush1.msra.mxu0 0.0
    %109 = vmatprep.subr.mxu0 0.0
    %110 = vmatpush1.msra.mxu0 0.0
    %111 = vmatprep.subr.mxu0 0.0
    %112 = vmatpush1.msra.mxu0 0.0
    %113 = vmatprep.subr.mxu0 0.0
    %114 = vmatpush1.msra.mxu0 0.0
    %115 = vmatprep.subr.mxu0 0.0
    %116 = vmatpush1.msra.mxu0 0.0
    %117 = vmatprep.subr.mxu0 0.0
    %118 = vmatpush1.msra.mxu0 0.0
    %119 = vmatprep.subr.mxu0 0.0
    %120 = vmatpush1.msra.mxu0 0.0
    %121 = vmatprep.subr.mxu0 0.0
    %122 = vmatpush1.msra.mxu0 0.0
    %123 = vmatprep.subr.mxu0 0.0
    %124 = vmatpush1.msra.mxu0 0.0
    %125 = vmatprep.subr.mxu0 0.0
    %126 = vmatpush1.msra.mxu0 0.0
    %127 = vmatprep.subr.mxu0 0.0
    %128 = vmatpush1.msra.mxu0 0.0
    %129 = vmatprep.subr.mxu0 0.0
    %130 = vmatpush1.msra.mxu0 0.0
    %131 = vmatprep.subr.mxu0 0.0
    %132 = vmatpush1.msra.mxu0 0.0
    %133 = vmatprep.subr.mxu0 0.0
    %134 = vmatpush1.msra.mxu0 0.0
    %135 = vmatprep.subr.mxu0 0.0
    %136 = vmatpush1.msra.mxu0 0.0
    %137 = vmatprep.subr.mxu0 0.0
    %138 = vmatpush1.msra.mxu0 0.0
    %139 = vmatprep.subr.mxu0 0.0
    %140 = vmatpush1.msra.mxu0 0.0
    %141 = vmatprep.subr.mxu0 0.0
    %142 = vmatpush1.msra.mxu0 0.0
    %143 = vmatprep.subr.mxu0 0.0
    %144 = vmatpush1.msra.mxu0 0.0
    %145 = vmatprep.subr.mxu0 0.0
    %146 = vmatpush1.msra.mxu0 0.0
    %147 = vmatprep.subr.mxu0 0.0
    %148 = vmatpush1.msra.mxu0 0.0
    %149 = vmatprep.subr.mxu0 0.0
    %150 = vmatpush1.msra.mxu0 0.0
    %151 = vmatprep.subr.mxu0 0.0
    %152 = vmatpush1.msra.mxu0 0.0
    %153 = vmatprep.mubr.f32.mxu0 0.0
    %154 = vmatmul.mubr.f32.gmra.mrb[0].mxu0 %v87
    %v155 = vpop.f32.mrb[0].mxu0
    %v156 = vadd.f32 %v68, %v155
    %v157 = vpop.f32.mrb[0].mxu0
    %v158 = vadd.f32 %v72, %v157
    %159 = vdwg.mxu0
    %160 = vmatprep.subr.mxu0 %v50
    %161 = vmatpush1.msra.mxu0 %v49
    %162 = vmatprep.subr.mxu0 %v54
    %163 = vmatpush1.msra.mxu0 %v53
    %164 = vmatprep.subr.mxu0 %v58
    %165 = vmatpush1.msra.mxu0 %v57
    %166 = vmatprep.subr.mxu0 %v62
    %167 = vmatpush1.msra.mxu0 %v61
    %168 = vmatprep.subr.mxu0 0.0
    %169 = vmatpush1.msra.mxu0 0.0
    %170 = vmatprep.subr.mxu0 0.0
    %171 = vmatpush1.msra.mxu0 0.0
    %172 = vmatprep.subr.mxu0 0.0
    %173 = vmatpush1.msra.mxu0 0.0
    %174 = vmatprep.subr.mxu0 0.0
    %175 = vmatpush1.msra.mxu0 0.0
    %176 = vmatprep.subr.mxu0 0.0
    %177 = vmatpush1.msra.mxu0 0.0
    %178 = vmatprep.subr.mxu0 0.0
    %179 = vmatpush1.msra.mxu0 0.0
    %180 = vmatprep.subr.mxu0 0.0
    %181 = vmatpush1.msra.mxu0 0.0
    %182 = vmatprep.subr.mxu0 0.0
    %183 = vmatpush1.msra.mxu0 0.0
    %184 = vmatprep.subr.mxu0 0.0
    %185 = vmatpush1.msra.mxu0 0.0
    %186 = vmatprep.subr.mxu0 0.0
    %187 = vmatpush1.msra.mxu0 0.0
    %188 = vmatprep.subr.mxu0 0.0
    %189 = vmatpush1.msra.mxu0 0.0
    %190 = vmatprep.subr.mxu0 0.0
    %191 = vmatpush1.msra.mxu0 0.0
    %192 = vmatprep.subr.mxu0 0.0
    %193 = vmatpush1.msra.mxu0 0.0
    %194 = vmatprep.subr.mxu0 0.0
    %195 = vmatpush1.msra.mxu0 0.0
    %196 = vmatprep.subr.mxu0 0.0
    %197 = vmatpush1.msra.mxu0 0.0
    %198 = vmatprep.subr.mxu0 0.0
    %199 = vmatpush1.msra.mxu0 0.0
    %200 = vmatprep.subr.mxu0 0.0
    %201 = vmatpush1.msra.mxu0 0.0
    %202 = vmatprep.subr.mxu0 0.0
    %203 = vmatpush1.msra.mxu0 0.0
    %204 = vmatprep.subr.mxu0 0.0
    %205 = vmatpush1.msra.mxu0 0.0
    %206 = vmatprep.subr.mxu0 0.0
    %207 = vmatpush1.msra.mxu0 0.0
    %208 = vmatprep.subr.mxu0 0.0
    %209 = vmatpush1.msra.mxu0 0.0
    %210 = vmatprep.subr.mxu0 0.0
    %211 = vmatpush1.msra.mxu0 0.0
    %212 = vmatprep.subr.mxu0 0.0
    %213 = vmatpush1.msra.mxu0 0.0
    %214 = vmatprep.subr.mxu0 0.0
    %215 = vmatpush1.msra.mxu0 0.0
    %216 = vmatprep.subr.mxu0 0.0
    %217 = vmatpush1.msra.mxu0 0.0
    %218 = vmatprep.subr.mxu0 0.0
    %219 = vmatpush1.msra.mxu0 0.0
    %220 = vmatprep.subr.mxu0 0.0
    %221 = vmatpush1.msra.mxu0 0.0
    %222 = vmatprep.subr.mxu0 0.0
    %223 = vmatpush1.msra.mxu0 0.0
    %224 = vmatprep.mubr.f32.mxu0 0.0
    %225 = vmatmul.mubr.f32.gmra.mrb[0].mxu0 %v87
    %v226 = vpop.f32.mrb[0].mxu0
    %v227 = vadd.f32 %v76, %v226
    %v228 = vpop.f32.mrb[0].mxu0
    %v229 = vadd.f32 %v80, %v228
    %230 = vdwg.mxu0
    %v231 = vmax.f32 %v156, 0.0
    %v232 = vmax.f32 %v158, 0.0
    %v233 = vmax.f32 %v227, 0.0
    %v234 = vmax.f32 %v229, 0.0
    %v235 = vld [vmem:[#allocation2] sm:$0xff]
    %v236 = vld [vmem:[#allocation2 + $0x8] sm:$0xff]
    %v237 = vld [vmem:[#allocation2 + $0x10] sm:$0xff]
    %v238 = vld [vmem:[#allocation2 + $0x18] sm:$0xff]
    %v239 = vld [vmem:[#allocation2 + $0x20] sm:$0xff]
    %v240 = vld [vmem:[#allocation2 + $0x28] sm:$0xff]
    %v241 = vld [vmem:[#allocation2 + $0x30] sm:$0xff]
    %v242 = vld [vmem:[#allocation2 + $0x38] sm:$0xff]
    %v243 = vld [vmem:[#allocation2 + $0x40] sm:$0xff]
    %v244 = vld [vmem:[#allocation2 + $0x48] sm:$0xff]
    %v245 = vld [vmem:[#allocation2 + $0x50] sm:$0xff]
    %v246 = vld [vmem:[#allocation2 + $0x58] sm:$0xff]
    %v247 = vld [vmem:[#allocation2 + $0x60] sm:$0xff]
    %v248 = vld [vmem:[#allocation2 + $0x68] sm:$0xff]
    %v249 = vld [vmem:[#allocation2 + $0x70] sm:$0xff]
    %v250 = vld [vmem:[#allocation2 + $0x78] sm:$0xff]
    %v251 = vld [vmem:[#allocation2 + $0x80] sm:$0xff]
    %v252 = vld [vmem:[#allocation2 + $0x88] sm:$0xff]
    %v253 = vld [vmem:[#allocation2 + $0x90] sm:$0xff]
    %v254 = vld [vmem:[#allocation2 + $0x98] sm:$0xff]
    %v255 = vld [vmem:[#allocation2 + $0xa0] sm:$0xff]
    %v256 = vld [vmem:[#allocation2 + $0xa8] sm:$0xff]
    %v257 = vld [vmem:[#allocation2 + $0xb0] sm:$0xff]
    %v258 = vld [vmem:[#allocation2 + $0xb8] sm:$0xff]
    %v259 = vld [vmem:[#allocation2 + $0xc0] sm:$0xff]
    %v260 = vld [vmem:[#allocation2 + $0xc8] sm:$0xff]
    %v261 = vld [vmem:[#allocation2 + $0xd0] sm:$0xff]
    %v262 = vld [vmem:[#allocation2 + $0xd8] sm:$0xff]
    %v263 = vld [vmem:[#allocation2 + $0xe0] sm:$0xff]
    %v264 = vld [vmem:[#allocation2 + $0xe8] sm:$0xff]
    %v265 = vld [vmem:[#allocation2 + $0xf0] sm:$0xff]
    %v266 = vld [vmem:[#allocation2 + $0xf8] sm:$0xff]
    %v267 = vld [vmem:[#allocation2 + $0x100] sm:$0xff]
    %v268 = vld [vmem:[#allocation2 + $0x108] sm:$0xff]
    %v269 = vld [vmem:[#allocation2 + $0x110] sm:$0xff]
    %v270 = vld [vmem:[#allocation2 + $0x118] sm:$0xff]
    %v271 = vld [vmem:[#allocation2 + $0x120] sm:$0xff]
    %v272 = vld [vmem:[#allocation2 + $0x128] sm:$0xff]
    %v273 = vld [vmem:[#allocation2 + $0x130] sm:$0xff]
    %v274 = vld [vmem:[#allocation2 + $0x138] sm:$0xff]
    %v275 = vld [vmem:[#allocation2 + $0x140] sm:$0xff]
    %v276 = vld [vmem:[#allocation2 + $0x148] sm:$0xff]
    %v277 = vld [vmem:[#allocation2 + $0x150] sm:$0xff]
    %v278 = vld [vmem:[#allocation2 + $0x158] sm:$0xff]
    %v279 = vld [vmem:[#allocation2 + $0x160] sm:$0xff]
    %v280 = vld [vmem:[#allocation2 + $0x168] sm:$0xff]
    %v281 = vld [vmem:[#allocation2 + $0x170] sm:$0xff]
    %v282 = vld [vmem:[#allocation2 + $0x178] sm:$0xff]
    %v283 = vld [vmem:[#allocation2 + $0x180] sm:$0xff]
    %v284 = vld [vmem:[#allocation2 + $0x188] sm:$0xff]
    %v285 = vld [vmem:[#allocation2 + $0x190] sm:$0xff]
    %v286 = vld [vmem:[#allocation2 + $0x198] sm:$0xff]
    %v287 = vld [vmem:[#allocation2 + $0x1a0] sm:$0xff]
    %v288 = vld [vmem:[#allocation2 + $0x1a8] sm:$0xff]
    %v289 = vld [vmem:[#allocation2 + $0x1b0] sm:$0xff]
    %v290 = vld [vmem:[#allocation2 + $0x1b8] sm:$0xff]
    %v291 = vld [vmem:[#allocation2 + $0x1c0] sm:$0xff]
    %v292 = vld [vmem:[#allocation2 + $0x1c8] sm:$0xff]
    %v293 = vld [vmem:[#allocation2 + $0x1d0] sm:$0xff]
    %v294 = vld [vmem:[#allocation2 + $0x1d8] sm:$0xff]
    %v295 = vld [vmem:[#allocation2 + $0x1e0] sm:$0xff]
    %v296 = vld [vmem:[#allocation2 + $0x1e8] sm:$0xff]
    %v297 = vld [vmem:[#allocation2 + $0x1f0] sm:$0xff]
    %v298 = vld [vmem:[#allocation2 + $0x1f8] sm:$0xff]
    %v299 = vld [vmem:[#allocation2 + $0x200] sm:$0xff]
    %v300 = vld [vmem:[#allocation2 + $0x208] sm:$0xff]
    %v301 = vld [vmem:[#allocation2 + $0x210] sm:$0xff]
    %v302 = vld [vmem:[#allocation2 + $0x218] sm:$0xff]
    %v303 = vld [vmem:[#allocation2 + $0x220] sm:$0xff]
    %v304 = vld [vmem:[#allocation2 + $0x228] sm:$0xff]
    %v305 = vld [vmem:[#allocation2 + $0x230] sm:$0xff]
    %v306 = vld [vmem:[#allocation2 + $0x238] sm:$0xff]
    %v307 = vld [vmem:[#allocation2 + $0x240] sm:$0xff]
    %v308 = vld [vmem:[#allocation2 + $0x248] sm:$0xff]
    %v309 = vld [vmem:[#allocation2 + $0x250] sm:$0xff]
    %v310 = vld [vmem:[#allocation2 + $0x258] sm:$0xff]
    %v311 = vld [vmem:[#allocation2 + $0x260] sm:$0xff]
    %v312 = vld [vmem:[#allocation2 + $0x268] sm:$0xff]
    %v313 = vld [vmem:[#allocation2 + $0x270] sm:$0xff]
    %v314 = vld [vmem:[#allocation2 + $0x278] sm:$0xff]
    %v315 = vld [vmem:[#allocation2 + $0x280] sm:$0xff]
    %v316 = vld [vmem:[#allocation2 + $0x288] sm:$0xff]
    %v317 = vld [vmem:[#allocation2 + $0x290] sm:$0xff]
    %v318 = vld [vmem:[#allocation2 + $0x298] sm:$0xff]
    %v319 = vld [vmem:[#allocation2 + $0x2a0] sm:$0xff]
    %v320 = vld [vmem:[#allocation2 + $0x2a8] sm:$0xff]
    %v321 = vld [vmem:[#allocation2 + $0x2b0] sm:$0xff]
    %v322 = vld [vmem:[#allocation2 + $0x2b8] sm:$0xff]
    %v323 = vld [vmem:[#allocation2 + $0x2c0] sm:$0xff]
    %v324 = vld [vmem:[#allocation2 + $0x2c8] sm:$0xff]
    %v325 = vld [vmem:[#allocation2 + $0x2d0] sm:$0xff]
    %v326 = vld [vmem:[#allocation2 + $0x2d8] sm:$0xff]
    %v327 = vld [vmem:[#allocation2 + $0x2e0] sm:$0xff]
    %v328 = vld [vmem:[#allocation2 + $0x2e8] sm:$0xff]
    %v329 = vld [vmem:[#allocation2 + $0x2f0] sm:$0xff]
    %v330 = vld [vmem:[#allocation2 + $0x2f8] sm:$0xff]
    %v331 = vld [vmem:[#allocation2 + $0x300] sm:$0xff]
    %v332 = vld [vmem:[#allocation2 + $0x308] sm:$0xff]
    %v333 = vld [vmem:[#allocation2 + $0x310] sm:$0xff]
    %v334 = vld [vmem:[#allocation2 + $0x318] sm:$0xff]
    %v335 = vld [vmem:[#allocation2 + $0x320] sm:$0xff]
    %v336 = vld [vmem:[#allocation2 + $0x328] sm:$0xff]
    %v337 = vld [vmem:[#allocation2 + $0x330] sm:$0xff]
    %v338 = vld [vmem:[#allocation2 + $0x338] sm:$0xff]
    %v339 = vld [vmem:[#allocation2 + $0x340] sm:$0xff]
    %v340 = vld [vmem:[#allocation2 + $0x348] sm:$0xff]
    %v341 = vld [vmem:[#allocation2 + $0x350] sm:$0xff]
    %v342 = vld [vmem:[#allocation2 + $0x358] sm:$0xff]
    %v343 = vld [vmem:[#allocation2 + $0x360] sm:$0xff]
    %v344 = vld [vmem:[#allocation2 + $0x368] sm:$0xff]
    %v345 = vld [vmem:[#allocation2 + $0x370] sm:$0xff]
    %v346 = vld [vmem:[#allocation2 + $0x378] sm:$0xff]
    %v347 = vld [vmem:[#allocation2 + $0x380] sm:$0xff]
    %v348 = vld [vmem:[#allocation2 + $0x388] sm:$0xff]
    %v349 = vld [vmem:[#allocation2 + $0x390] sm:$0xff]
    %v350 = vld [vmem:[#allocation2 + $0x398] sm:$0xff]
    %v351 = vld [vmem:[#allocation2 + $0x3a0] sm:$0xff]
    %v352 = vld [vmem:[#allocation2 + $0x3a8] sm:$0xff]
    %v353 = vld [vmem:[#allocation2 + $0x3b0] sm:$0xff]
    %v354 = vld [vmem:[#allocation2 + $0x3b8] sm:$0xff]
    %v355 = vld [vmem:[#allocation2 + $0x3c0] sm:$0xff]
    %v356 = vld [vmem:[#allocation2 + $0x3c8] sm:$0xff]
    %v357 = vld [vmem:[#allocation2 + $0x3d0] sm:$0xff]
    %v358 = vld [vmem:[#allocation2 + $0x3d8] sm:$0xff]
    %v359 = vld [vmem:[#allocation2 + $0x3e0] sm:$0xff]
    %v360 = vld [vmem:[#allocation2 + $0x3e8] sm:$0xff]
    %v361 = vld [vmem:[#allocation2 + $0x3f0] sm:$0xff]
    %v362 = vld [vmem:[#allocation2 + $0x3f8] sm:$0xff]
    %v363 = vld [vmem:[%s4] sm:$0x3]
    %v365 = vlaneseq
    %v366 = vshrl.u32 %v365, 7
    %v367 = vsub.s32 0, %v366
    %v368 = vrot.slane %v363, %v367
    %v369 = vlaneseq
    %v370 = vshrl.u32 %v369, 7
    %v371 = vsub.s32 1, %v370
    %v372 = vrot.slane %v363, %v371
    %375 = vmatprep.subr.mxu0 %v236
    %376 = vmatpush1.msra.mxu0 %v235
    %377 = vmatprep.subr.mxu0 %v238
    %378 = vmatpush1.msra.mxu0 %v237
    %379 = vmatprep.subr.mxu0 %v240
    %380 = vmatpush1.msra.mxu0 %v239
    %381 = vmatprep.subr.mxu0 %v242
    %382 = vmatpush1.msra.mxu0 %v241
    %383 = vmatprep.subr.mxu0 %v244
    %384 = vmatpush1.msra.mxu0 %v243
    %385 = vmatprep.subr.mxu0 %v246
    %386 = vmatpush1.msra.mxu0 %v245
    %387 = vmatprep.subr.mxu0 %v248
    %388 = vmatpush1.msra.mxu0 %v247
    %389 = vmatprep.subr.mxu0 %v250
    %390 = vmatpush1.msra.mxu0 %v249
    %391 = vmatprep.subr.mxu0 %v252
    %392 = vmatpush1.msra.mxu0 %v251
    %393 = vmatprep.subr.mxu0 %v254
    %394 = vmatpush1.msra.mxu0 %v253
    %395 = vmatprep.subr.mxu0 %v256
    %396 = vmatpush1.msra.mxu0 %v255
    %397 = vmatprep.subr.mxu0 %v258
    %398 = vmatpush1.msra.mxu0 %v257
    %399 = vmatprep.subr.mxu0 %v260
    %400 = vmatpush1.msra.mxu0 %v259
    %401 = vmatprep.subr.mxu0 %v262
    %402 = vmatpush1.msra.mxu0 %v261
    %403 = vmatprep.subr.mxu0 %v264
    %404 = vmatpush1.msra.mxu0 %v263
    %405 = vmatprep.subr.mxu0 %v266
    %406 = vmatpush1.msra.mxu0 %v265
    %407 = vmatprep.subr.mxu0 %v268
    %408 = vmatpush1.msra.mxu0 %v267
    %409 = vmatprep.subr.mxu0 %v270
    %410 = vmatpush1.msra.mxu0 %v269
    %411 = vmatprep.subr.mxu0 %v272
    %412 = vmatpush1.msra.mxu0 %v271
    %413 = vmatprep.subr.mxu0 %v274
    %414 = vmatpush1.msra.mxu0 %v273
    %415 = vmatprep.subr.mxu0 %v276
    %416 = vmatpush1.msra.mxu0 %v275
    %417 = vmatprep.subr.mxu0 %v278
    %418 = vmatpush1.msra.mxu0 %v277
    %419 = vmatprep.subr.mxu0 %v280
    %420 = vmatpush1.msra.mxu0 %v279
    %421 = vmatprep.subr.mxu0 %v282
    %422 = vmatpush1.msra.mxu0 %v281
    %423 = vmatprep.subr.mxu0 %v284
    %424 = vmatpush1.msra.mxu0 %v283
    %425 = vmatprep.subr.mxu0 %v286
    %426 = vmatpush1.msra.mxu0 %v285
    %427 = vmatprep.subr.mxu0 %v288
    %428 = vmatpush1.msra.mxu0 %v287
    %429 = vmatprep.subr.mxu0 %v290
    %430 = vmatpush1.msra.mxu0 %v289
    %431 = vmatprep.subr.mxu0 %v292
    %432 = vmatpush1.msra.mxu0 %v291
    %433 = vmatprep.subr.mxu0 %v294
    %434 = vmatpush1.msra.mxu0 %v293
    %435 = vmatprep.subr.mxu0 %v296
    %436 = vmatpush1.msra.mxu0 %v295
    %437 = vmatprep.subr.mxu0 %v298
    %438 = vmatpush1.msra.mxu0 %v297
    %439 = vmatprep.mubr.f32.mxu0 %v232
    %440 = vmatmul.mubr.f32.gmra.mrb[0].mxu0 %v231
    %v441 = vpop.f32.mrb[0].mxu0
    %v442 = vadd.f32 %v368, %v441
    %v443 = vpop.f32.mrb[0].mxu0
    %v444 = vadd.f32 %v372, %v443
    %445 = vdwg.mxu0
    %446 = vmatprep.subr.mxu0 %v300
    %447 = vmatpush1.msra.mxu0 %v299
    %448 = vmatprep.subr.mxu0 %v302
    %449 = vmatpush1.msra.mxu0 %v301
    %450 = vmatprep.subr.mxu0 %v304
    %451 = vmatpush1.msra.mxu0 %v303
    %452 = vmatprep.subr.mxu0 %v306
    %453 = vmatpush1.msra.mxu0 %v305
    %454 = vmatprep.subr.mxu0 %v308
    %455 = vmatpush1.msra.mxu0 %v307
    %456 = vmatprep.subr.mxu0 %v310
    %457 = vmatpush1.msra.mxu0 %v309
    %458 = vmatprep.subr.mxu0 %v312
    %459 = vmatpush1.msra.mxu0 %v311
    %460 = vmatprep.subr.mxu0 %v314
    %461 = vmatpush1.msra.mxu0 %v313
    %462 = vmatprep.subr.mxu0 %v316
    %463 = vmatpush1.msra.mxu0 %v315
    %464 = vmatprep.subr.mxu0 %v318
    %465 = vmatpush1.msra.mxu0 %v317
    %466 = vmatprep.subr.mxu0 %v320
    %467 = vmatpush1.msra.mxu0 %v319
    %468 = vmatprep.subr.mxu0 %v322
    %469 = vmatpush1.msra.mxu0 %v321
    %470 = vmatprep.subr.mxu0 %v324
    %471 = vmatpush1.msra.mxu0 %v323
    %472 = vmatprep.subr.mxu0 %v326
    %473 = vmatpush1.msra.mxu0 %v325
    %474 = vmatprep.subr.mxu0 %v328
    %475 = vmatpush1.msra.mxu0 %v327
    %476 = vmatprep.subr.mxu0 %v330
    %477 = vmatpush1.msra.mxu0 %v329
    %478 = vmatprep.subr.mxu0 %v332
    %479 = vmatpush1.msra.mxu0 %v331
    %480 = vmatprep.subr.mxu0 %v334
    %481 = vmatpush1.msra.mxu0 %v333
    %482 = vmatprep.subr.mxu0 %v336
    %483 = vmatpush1.msra.mxu0 %v335
    %484 = vmatprep.subr.mxu0 %v338
    %485 = vmatpush1.msra.mxu0 %v337
    %486 = vmatprep.subr.mxu0 %v340
    %487 = vmatpush1.msra.mxu0 %v339
    %488 = vmatprep.subr.mxu0 %v342
    %489 = vmatpush1.msra.mxu0 %v341
    %490 = vmatprep.subr.mxu0 %v344
    %491 = vmatpush1.msra.mxu0 %v343
    %492 = vmatprep.subr.mxu0 %v346
    %493 = vmatpush1.msra.mxu0 %v345
    %494 = vmatprep.subr.mxu0 %v348
    %495 = vmatpush1.msra.mxu0 %v347
    %496 = vmatprep.subr.mxu0 %v350
    %497 = vmatpush1.msra.mxu0 %v349
    %498 = vmatprep.subr.mxu0 %v352
    %499 = vmatpush1.msra.mxu0 %v351
    %500 = vmatprep.subr.mxu0 %v354
    %501 = vmatpush1.msra.mxu0 %v353
    %502 = vmatprep.subr.mxu0 %v356
    %503 = vmatpush1.msra.mxu0 %v355
    %504 = vmatprep.subr.mxu0 %v358
    %505 = vmatpush1.msra.mxu0 %v357
    %506 = vmatprep.subr.mxu0 %v360
    %507 = vmatpush1.msra.mxu0 %v359
    %508 = vmatprep.subr.mxu0 %v362
    %509 = vmatpush1.msra.mxu0 %v361
    %510 = vmatprep.mubr.f32.mxu0 %v234
    %511 = vmatmul.mubr.f32.gmra.mrb[0].mxu0 %v233
    %v512 = vpop.f32.mrb[0].mxu0
    %v513 = vadd.f32 %v442, %v512
    %v514 = vpop.f32.mrb[0].mxu0
    %v515 = vadd.f32 %v444, %v514
    %516 = vdwg.mxu0
    %v517 = vmax.f32 %v513, 0.0
    %v518 = vmax.f32 %v515, 0.0
    %v519 = vld [vmem:[%s5] sm:$0xff]
    %v520 = vld [vmem:[%s5 + $0x8] sm:$0xff]
    %v521 = vld [vmem:[%s5 + $0x10] sm:$0xff]
    %v522 = vld [vmem:[%s5 + $0x18] sm:$0xff]
    %v523 = vld [vmem:[%s5 + $0x20] sm:$0xff]
    %v524 = vld [vmem:[%s5 + $0x28] sm:$0xff]
    %v525 = vld [vmem:[%s5 + $0x30] sm:$0xff]
    %v526 = vld [vmem:[%s5 + $0x38] sm:$0xff]
    %v527 = vld [vmem:[%s5 + $0x40] sm:$0xff]
    %v528 = vld [vmem:[%s5 + $0x48] sm:$0xff]
    %v529 = vld [vmem:[%s5 + $0x50] sm:$0xff]
    %v530 = vld [vmem:[%s5 + $0x58] sm:$0xff]
    %v531 = vld [vmem:[%s5 + $0x60] sm:$0xff]
    %v532 = vld [vmem:[%s5 + $0x68] sm:$0xff]
    %v533 = vld [vmem:[%s5 + $0x70] sm:$0xff]
    %v534 = vld [vmem:[%s5 + $0x78] sm:$0xff]
    %v535 = vld [vmem:[%s5 + $0x80] sm:$0xff]
    %v536 = vld [vmem:[%s5 + $0x88] sm:$0xff]
    %v537 = vld [vmem:[%s5 + $0x90] sm:$0xff]
    %v538 = vld [vmem:[%s5 + $0x98] sm:$0xff]
    %v539 = vld [vmem:[%s5 + $0xa0] sm:$0xff]
    %v540 = vld [vmem:[%s5 + $0xa8] sm:$0xff]
    %v541 = vld [vmem:[%s5 + $0xb0] sm:$0xff]
    %v542 = vld [vmem:[%s5 + $0xb8] sm:$0xff]
    %v543 = vld [vmem:[%s5 + $0xc0] sm:$0xff]
    %v544 = vld [vmem:[%s5 + $0xc8] sm:$0xff]
    %v545 = vld [vmem:[%s5 + $0xd0] sm:$0xff]
    %v546 = vld [vmem:[%s5 + $0xd8] sm:$0xff]
    %v547 = vld [vmem:[%s5 + $0xe0] sm:$0xff]
    %v548 = vld [vmem:[%s5 + $0xe8] sm:$0xff]
    %v549 = vld [vmem:[%s5 + $0xf0] sm:$0xff]
    %v550 = vld [vmem:[%s5 + $0xf8] sm:$0xff]
    %v551 = vld [vmem:[%s6] sm:$0x1]
    %v553 = vlaneseq
    %v554 = vshrl.u32 %v553, 7
    %v555 = vsub.s32 0, %v554
    %v556 = vrot.slane %v551, %v555
    %558 = vmatprep.subr.mxu0 0.0
    %559 = vmatpush1.msra.mxu0 %v519
    %560 = vmatprep.subr.mxu0 0.0
    %561 = vmatpush1.msra.mxu0 %v520
    %562 = vmatprep.subr.mxu0 0.0
    %563 = vmatpush1.msra.mxu0 %v521
    %564 = vmatprep.subr.mxu0 0.0
    %565 = vmatpush1.msra.mxu0 %v522
    %566 = vmatprep.subr.mxu0 0.0
    %567 = vmatpush1.msra.mxu0 %v523
    %568 = vmatprep.subr.mxu0 0.0
    %569 = vmatpush1.msra.mxu0 %v524
    %570 = vmatprep.subr.mxu0 0.0
    %571 = vmatpush1.msra.mxu0 %v525
    %572 = vmatprep.subr.mxu0 0.0
    %573 = vmatpush1.msra.mxu0 %v526
    %574 = vmatprep.subr.mxu0 0.0
    %575 = vmatpush1.msra.mxu0 %v527
    %576 = vmatprep.subr.mxu0 0.0
    %577 = vmatpush1.msra.mxu0 %v528
    %578 = vmatprep.subr.mxu0 0.0
    %579 = vmatpush1.msra.mxu0 %v529
    %580 = vmatprep.subr.mxu0 0.0
    %581 = vmatpush1.msra.mxu0 %v530
    %582 = vmatprep.subr.mxu0 0.0
    %583 = vmatpush1.msra.mxu0 %v531
    %584 = vmatprep.subr.mxu0 0.0
    %585 = vmatpush1.msra.mxu0 %v532
    %586 = vmatprep.subr.mxu0 0.0
    %587 = vmatpush1.msra.mxu0 %v533
    %588 = vmatprep.subr.mxu0 0.0
    %589 = vmatpush1.msra.mxu0 %v534
    %590 = vmatprep.subr.mxu0 0.0
    %591 = vmatpush1.msra.mxu0 %v535
    %592 = vmatprep.subr.mxu0 0.0
    %593 = vmatpush1.msra.mxu0 %v536
    %594 = vmatprep.subr.mxu0 0.0
    %595 = vmatpush1.msra.mxu0 %v537
    %596 = vmatprep.subr.mxu0 0.0
    %597 = vmatpush1.msra.mxu0 %v538
    %598 = vmatprep.subr.mxu0 0.0
    %599 = vmatpush1.msra.mxu0 %v539
    %600 = vmatprep.subr.mxu0 0.0
    %601 = vmatpush1.msra.mxu0 %v540
    %602 = vmatprep.subr.mxu0 0.0
    %603 = vmatpush1.msra.mxu0 %v541
    %604 = vmatprep.subr.mxu0 0.0
    %605 = vmatpush1.msra.mxu0 %v542
    %606 = vmatprep.subr.mxu0 0.0
    %607 = vmatpush1.msra.mxu0 %v543
    %608 = vmatprep.subr.mxu0 0.0
    %609 = vmatpush1.msra.mxu0 %v544
    %610 = vmatprep.subr.mxu0 0.0
    %611 = vmatpush1.msra.mxu0 %v545
    %612 = vmatprep.subr.mxu0 0.0
    %613 = vmatpush1.msra.mxu0 %v546
    %614 = vmatprep.subr.mxu0 0.0
    %615 = vmatpush1.msra.mxu0 %v547
    %616 = vmatprep.subr.mxu0 0.0
    %617 = vmatpush1.msra.mxu0 %v548
    %618 = vmatprep.subr.mxu0 0.0
    %619 = vmatpush1.msra.mxu0 %v549
    %620 = vmatprep.subr.mxu0 0.0
    %621 = vmatpush1.msra.mxu0 %v550
    %622 = vmatprep.mubr.f32.mxu0 %v518
    %623 = vmatmul.mubr.f32.gmra.mrb[0].mxu0 %v517
    %v624 = vpop.f32.mrb[0].mxu0
    %v625 = vadd.f32 %v556, %v624
    %v626 = vpop.f32.mrb[0].mxu0
    %627 = vdwg.mxu0
    %v628 = vmax.f32 %v625, 0.0
    %v629 = vld [vmem:[%s7] sm:$0xff]
    %v630 = vld [vmem:[%s7 + $0x8] sm:$0xff]
    %v631 = vld [vmem:[%s7 + $0x10] sm:$0xff]
    %v632 = vld [vmem:[%s7 + $0x18] sm:$0xff]
    %v633 = vld [vmem:[%s7 + $0x20] sm:$0xff]
    %v634 = vld [vmem:[%s7 + $0x28] sm:$0xff]
    %v635 = vld [vmem:[%s7 + $0x30] sm:$0xff]
    %v636 = vld [vmem:[%s7 + $0x38] sm:$0xff]
    %v637 = vld [vmem:[%s7 + $0x40] sm:$0xff]
    %v638 = vld [vmem:[%s7 + $0x48] sm:$0xff]
    %v639 = vld [vmem:[%s7 + $0x50] sm:$0xff]
    %v640 = vld [vmem:[%s7 + $0x58] sm:$0xff]
    %v641 = vld [vmem:[%s7 + $0x60] sm:$0xff]
    %v642 = vld [vmem:[%s7 + $0x68] sm:$0xff]
    %v643 = vld [vmem:[%s7 + $0x70] sm:$0xff]
    %v644 = vld [vmem:[%s7 + $0x78] sm:$0xff]
    %v645 = vld [vmem:[%s8] sm:$0x1]
    %v647 = vlaneseq
    %v648 = vshrl.u32 %v647, 7
    %v649 = vsub.s32 0, %v648
    %v650 = vrot.slane %v645, %v649
    %652 = vmatprep.subr.mxu0 0.0
    %653 = vmatpush1.msra.mxu0 %v629
    %654 = vmatprep.subr.mxu0 0.0
    %655 = vmatpush1.msra.mxu0 %v630
    %656 = vmatprep.subr.mxu0 0.0
    %657 = vmatpush1.msra.mxu0 %v631
    %658 = vmatprep.subr.mxu0 0.0
    %659 = vmatpush1.msra.mxu0 %v632
    %660 = vmatprep.subr.mxu0 0.0
    %661 = vmatpush1.msra.mxu0 %v633
    %662 = vmatprep.subr.mxu0 0.0
    %663 = vmatpush1.msra.mxu0 %v634
    %664 = vmatprep.subr.mxu0 0.0
    %665 = vmatpush1.msra.mxu0 %v635
    %666 = vmatprep.subr.mxu0 0.0
    %667 = vmatpush1.msra.mxu0 %v636
    %668 = vmatprep.subr.mxu0 0.0
    %669 = vmatpush1.msra.mxu0 %v637
    %670 = vmatprep.subr.mxu0 0.0
    %671 = vmatpush1.msra.mxu0 %v638
    %672 = vmatprep.subr.mxu0 0.0
    %673 = vmatpush1.msra.mxu0 %v639
    %674 = vmatprep.subr.mxu0 0.0
    %675 = vmatpush1.msra.mxu0 %v640
    %676 = vmatprep.subr.mxu0 0.0
    %677 = vmatpush1.msra.mxu0 %v641
    %678 = vmatprep.subr.mxu0 0.0
    %679 = vmatpush1.msra.mxu0 %v642
    %680 = vmatprep.subr.mxu0 0.0
    %681 = vmatpush1.msra.mxu0 %v643
    %682 = vmatprep.subr.mxu0 0.0
    %683 = vmatpush1.msra.mxu0 %v644
    %684 = vmatprep.subr.mxu0 0.0
    %685 = vmatpush1.msra.mxu0 0.0
    %686 = vmatprep.subr.mxu0 0.0
    %687 = vmatpush1.msra.mxu0 0.0
    %688 = vmatprep.subr.mxu0 0.0
    %689 = vmatpush1.msra.mxu0 0.0
    %690 = vmatprep.subr.mxu0 0.0
    %691 = vmatpush1.msra.mxu0 0.0
    %692 = vmatprep.subr.mxu0 0.0
    %693 = vmatpush1.msra.mxu0 0.0
    %694 = vmatprep.subr.mxu0 0.0
    %695 = vmatpush1.msra.mxu0 0.0
    %696 = vmatprep.subr.mxu0 0.0
    %697 = vmatpush1.msra.mxu0 0.0
    %698 = vmatprep.subr.mxu0 0.0
    %699 = vmatpush1.msra.mxu0 0.0
    %700 = vmatprep.subr.mxu0 0.0
    %701 = vmatpush1.msra.mxu0 0.0
    %702 = vmatprep.subr.mxu0 0.0
    %703 = vmatpush1.msra.mxu0 0.0
    %704 = vmatprep.subr.mxu0 0.0
    %705 = vmatpush1.msra.mxu0 0.0
    %706 = vmatprep.subr.mxu0 0.0
    %707 = vmatpush1.msra.mxu0 0.0
    %708 = vmatprep.subr.mxu0 0.0
    %709 = vmatpush1.msra.mxu0 0.0
    %710 = vmatprep.subr.mxu0 0.0
    %711 = vmatpush1.msra.mxu0 0.0
    %712 = vmatprep.subr.mxu0 0.0
    %713 = vmatpush1.msra.mxu0 0.0
    %714 = vmatprep.subr.mxu0 0.0
    %715 = vmatpush1.msra.mxu0 0.0
    %716 = vmatprep.mubr.f32.mxu0 0.0
    %717 = vmatmul.mubr.f32.gmra.mrb[0].mxu0 %v628
    %v718 = vpop.f32.mrb[0].mxu0
    %v719 = vadd.f32 %v650, %v718
    %v720 = vpop.f32.mrb[0].mxu0
    %721 = vdwg.mxu0
    %722 = vst [vmem:[%s9] sm:$0xff] %v719
    // Predicated region
    $region42: #{improved_nn_forward.1} parent=1 // pred_check
      _
    $region43: #{improved_nn_forward.1} parent=1 // pred_check_branch
      %724 = sbr.rel (0) target = $region45
    $region44: #{improved_nn_forward.1} parent=1 // pred_region
      _
    $region45: #{improved_nn_forward.1} parent=1 // pred_fallthru
      _
    // Predicated region
    $region46: #{improved_nn_forward.1} parent=1 // pred_check
      _
    $region47: #{improved_nn_forward.1} parent=1 // pred_check_branch
      %726 = sbr.rel (0) target = $region49
    $region48: #{improved_nn_forward.1} parent=1 // pred_region
      _
    $region49: #{improved_nn_forward.1} parent=1 // pred_fallthru
      _
    %727 = vsyncpa [#allocation3], 1

</llo_original>
